<compile_context>
chip_gen: v5e
topology: v5e:2x2
jax: 0.10.0
libtpu: 0.0.40
codegen_flags: <defaults>
</compile_context>

<pallas_src>
import numpy as np
import jax
import jax.numpy as jnp
from jax.experimental import pallas as pl
from jax.experimental.pallas import tpu as pltpu

WINDOW_LENGTH = 5
BETA = 12.0

# Deterministic "parameter" init: normalized symmetric Kaiser window
# (np.kaiser == torch.signal.windows.kaiser(..., sym=True)).
_w = np.kaiser(WINDOW_LENGTH, BETA)
KERNEL = tuple((_w / _w.sum()).astype(np.float32).tolist())
K0 = float(KERNEL[0])  # == KERNEL[4]  (symmetric)
K1 = float(KERNEL[1])  # == KERNEL[3]
K2 = float(KERNEL[2])


def _croll(v, shift, axis):
    """Circular roll by a static shift.

    Uses the XLU rotate (pltpu.roll) when the array's trailing dims are
    vreg-tile aligned; otherwise falls back to slice+concat (jnp.roll).
    Because the filter is symmetric we always consume roll(s) + roll(n-s),
    so either shift-sign convention gives the same result.
    """
    size = v.shape[axis]
    shift = shift % size
    if shift == 0:
        return v
    tile_aligned = (v.shape[-1] % 128 == 0) and (v.shape[-2] % 8 == 0)
    if tile_aligned and axis >= v.ndim - 2:
        return pltpu.roll(v, shift, axis=axis)
    return jnp.roll(v, shift, axis=axis)


def _sym_filter(v, axis):
    """5-tap symmetric circular convolution along `axis`, f32 accumulation."""
    size = v.shape[axis]
    f32 = lambda a: a.astype(jnp.float32)
    acc = K2 * f32(v)
    acc = acc + K1 * (f32(_croll(v, 1, axis)) + f32(_croll(v, size - 1, axis)))
    acc = acc + K0 * (f32(_croll(v, 2, axis)) + f32(_croll(v, size - 2, axis)))
    return acc


def _kaiser_filter_kernel(x_ref, o_ref):
    # Block: (CB, H, W) where CB indexes merged (N*C) slabs.
    x = x_ref[...]
    y = _sym_filter(x, axis=1)   # filter along H (sublane axis); rolls in native dtype
    z = _sym_filter(y, axis=2)   # filter along W (lane axis); f32 throughout
    o_ref[...] = z.astype(o_ref.dtype)


def kaiser_filter(x, *, vmem_budget_bytes=24 * 1024 * 1024):
    """x: (N, C, H, W) float array -> same shape/dtype, Kaiser-filtered (circular)."""
    N, C, H, W = x.shape
    NC = N * C
    xr = x.reshape(NC, H, W)  # leading-dim merge: free (no data movement)

    # Per-channel VMEM footprint estimate:
    #   2x input block (double buffer) + 2x output block (double buffer)
    #   + ~4 live f32 temporaries during the two filter passes.
    slab_in = H * W * x.dtype.itemsize
    slab_f32 = H * W * 4
    per_chan = 4 * slab_in + 4 * slab_f32
    cb = int(max(1, min(NC, vmem_budget_bytes // max(1, per_chan))))
    grid = (pl.cdiv(NC, cb),)

    out = pl.pallas_call(
        _kaiser_filter_kernel,
        out_shape=jax.ShapeDtypeStruct((NC, H, W), x.dtype),
        grid_spec=pltpu.PrefetchScalarGridSpec(
            num_scalar_prefetch=0,
            grid=grid,
            in_specs=[pl.BlockSpec((cb, H, W), lambda i: (i, 0, 0))],
            out_specs=pl.BlockSpec((cb, H, W), lambda i: (i, 0, 0)),
        ),
        compiler_params=pltpu.CompilerParams(
            dimension_semantics=("parallel",),
            vmem_limit_bytes=48 * 1024 * 1024,
        ),
    )(xr)
    return out.reshape(N, C, H, W)


def _reference_fft(x):
    """Pure-JAX replica of the PyTorch FFT-based forward, for validation."""
    k = jnp.asarray(KERNEL, dtype=x.dtype)

    def filter1d(x, dim):
        x = jnp.swapaxes(x, dim, -1)
        n = x.shape[-1]
        psf = jnp.zeros((n,), dtype=x.dtype).at[: k.shape[0]].set(k)
        psf = jnp.roll(psf, -(k.shape[0] // 2))
        xf = jnp.fft.rfft(x, axis=-1)
        otf = jnp.fft.rfft(psf)
        xf = xf * otf
        x = jnp.fft.irfft(xf, n=n, axis=-1).astype(x.dtype)
        return jnp.swapaxes(x, dim, -1)

    x = filter1d(x, 2)
    x = filter1d(x, 3)
    return x


if __name__ == "__main__":
    key = jax.random.PRNGKey(0)
    x = jax.random.normal(key, (2, 4, 16, 16), dtype=jnp.float32)

    out = jax.block_until_ready(kaiser_filter(x))

    ref = jax.block_until_ready(_reference_fft(x))
    if not np.allclose(np.asarray(out), np.asarray(ref), atol=1e-5, rtol=1e-5):
        raise AssertionError("Pallas KaiserFilter does not match FFT reference")

    print("KERNEL_OK")
</pallas_src>

<mosaic_0001>
module attributes {stable_mosaic.version = 11 : i64} {
  func.func @_kaiser_filter_kernel(%arg0: i32, %arg1: memref<8x16x16xf32, #tpu.memory_space<vmem>>, %arg2: memref<8x16x16xf32, #tpu.memory_space<vmem>>) attributes {dimension_semantics = [#tpu.dimension_semantics<parallel>], iteration_bounds = array<i64: 1>, scalar_prefetch = 0 : i64, scratch_operands = 0 : i64, tpu.core_type = #tpu.core_type<tc>, window_params = [{transform_indices = @transform_0, window_bounds = array<i64: 8, 16, 16>}, {transform_indices = @transform_1, window_bounds = array<i64: 8, 16, 16>}]} {
    %c0 = arith.constant 0 : index
    %c0_0 = arith.constant 0 : index
    %c0_1 = arith.constant 0 : index
    %0 = vector.load %arg1[%c0, %c0_0, %c0_1] : memref<8x16x16xf32, #tpu.memory_space<vmem>>, vector<8x16x16xf32>
    %cst = arith.constant 0.698591828 : f32
    %1 = vector.broadcast %cst : f32 to vector<8x16x16xf32>
    %2 = arith.mulf %1, %0 : vector<8x16x16xf32>
    %3 = vector.extract_strided_slice %0 {offsets = [0, 15, 0], sizes = [8, 1, 16], strides = [1, 1, 1]} : vector<8x16x16xf32> to vector<8x1x16xf32>
    %4 = vector.extract_strided_slice %0 {offsets = [0, 0, 0], sizes = [8, 15, 16], strides = [1, 1, 1]} : vector<8x16x16xf32> to vector<8x15x16xf32>
    %5 = tpu.concatenate %3, %4 in 1 : vector<8x1x16xf32>, vector<8x15x16xf32> -> vector<8x16x16xf32>
    %6 = vector.extract_strided_slice %0 {offsets = [0, 1, 0], sizes = [8, 15, 16], strides = [1, 1, 1]} : vector<8x16x16xf32> to vector<8x15x16xf32>
    %7 = vector.extract_strided_slice %0 {offsets = [0, 0, 0], sizes = [8, 1, 16], strides = [1, 1, 1]} : vector<8x16x16xf32> to vector<8x1x16xf32>
    %8 = tpu.concatenate %6, %7 in 1 : vector<8x15x16xf32>, vector<8x1x16xf32> -> vector<8x16x16xf32>
    %9 = arith.addf %5, %8 : vector<8x16x16xf32>
    %cst_2 = arith.constant 0.15066722 : f32
    %10 = vector.broadcast %cst_2 : f32 to vector<8x16x16xf32>
    %11 = arith.mulf %10, %9 : vector<8x16x16xf32>
    %12 = arith.addf %2, %11 : vector<8x16x16xf32>
    %13 = vector.extract_strided_slice %0 {offsets = [0, 14, 0], sizes = [8, 2, 16], strides = [1, 1, 1]} : vector<8x16x16xf32> to vector<8x2x16xf32>
    %14 = vector.extract_strided_slice %0 {offsets = [0, 0, 0], sizes = [8, 14, 16], strides = [1, 1, 1]} : vector<8x16x16xf32> to vector<8x14x16xf32>
    %15 = tpu.concatenate %13, %14 in 1 : vector<8x2x16xf32>, vector<8x14x16xf32> -> vector<8x16x16xf32>
    %16 = vector.extract_strided_slice %0 {offsets = [0, 2, 0], sizes = [8, 14, 16], strides = [1, 1, 1]} : vector<8x16x16xf32> to vector<8x14x16xf32>
    %17 = vector.extract_strided_slice %0 {offsets = [0, 0, 0], sizes = [8, 2, 16], strides = [1, 1, 1]} : vector<8x16x16xf32> to vector<8x2x16xf32>
    %18 = tpu.concatenate %16, %17 in 1 : vector<8x14x16xf32>, vector<8x2x16xf32> -> vector<8x16x16xf32>
    %19 = arith.addf %15, %18 : vector<8x16x16xf32>
    %cst_3 = arith.constant 3.68670953E-5 : f32
    %20 = vector.broadcast %cst_3 : f32 to vector<8x16x16xf32>
    %21 = arith.mulf %20, %19 : vector<8x16x16xf32>
    %22 = arith.addf %12, %21 : vector<8x16x16xf32>
    %cst_4 = arith.constant 0.698591828 : f32
    %23 = vector.broadcast %cst_4 : f32 to vector<8x16x16xf32>
    %24 = arith.mulf %23, %22 : vector<8x16x16xf32>
    %25 = vector.extract_strided_slice %22 {offsets = [0, 0, 15], sizes = [8, 16, 1], strides = [1, 1, 1]} : vector<8x16x16xf32> to vector<8x16x1xf32>
    %26 = vector.extract_strided_slice %22 {offsets = [0, 0, 0], sizes = [8, 16, 15], strides = [1, 1, 1]} : vector<8x16x16xf32> to vector<8x16x15xf32>
    %27 = tpu.concatenate %25, %26 in 2 : vector<8x16x1xf32>, vector<8x16x15xf32> -> vector<8x16x16xf32>
    %28 = vector.extract_strided_slice %22 {offsets = [0, 0, 1], sizes = [8, 16, 15], strides = [1, 1, 1]} : vector<8x16x16xf32> to vector<8x16x15xf32>
    %29 = vector.extract_strided_slice %22 {offsets = [0, 0, 0], sizes = [8, 16, 1], strides = [1, 1, 1]} : vector<8x16x16xf32> to vector<8x16x1xf32>
    %30 = tpu.concatenate %28, %29 in 2 : vector<8x16x15xf32>, vector<8x16x1xf32> -> vector<8x16x16xf32>
    %31 = arith.addf %27, %30 : vector<8x16x16xf32>
    %cst_5 = arith.constant 0.15066722 : f32
    %32 = vector.broadcast %cst_5 : f32 to vector<8x16x16xf32>
    %33 = arith.mulf %32, %31 : vector<8x16x16xf32>
    %34 = arith.addf %24, %33 : vector<8x16x16xf32>
    %35 = vector.extract_strided_slice %22 {offsets = [0, 0, 14], sizes = [8, 16, 2], strides = [1, 1, 1]} : vector<8x16x16xf32> to vector<8x16x2xf32>
    %36 = vector.extract_strided_slice %22 {offsets = [0, 0, 0], sizes = [8, 16, 14], strides = [1, 1, 1]} : vector<8x16x16xf32> to vector<8x16x14xf32>
    %37 = tpu.concatenate %35, %36 in 2 : vector<8x16x2xf32>, vector<8x16x14xf32> -> vector<8x16x16xf32>
    %38 = vector.extract_strided_slice %22 {offsets = [0, 0, 2], sizes = [8, 16, 14], strides = [1, 1, 1]} : vector<8x16x16xf32> to vector<8x16x14xf32>
    %39 = vector.extract_strided_slice %22 {offsets = [0, 0, 0], sizes = [8, 16, 2], strides = [1, 1, 1]} : vector<8x16x16xf32> to vector<8x16x2xf32>
    %40 = tpu.concatenate %38, %39 in 2 : vector<8x16x14xf32>, vector<8x16x2xf32> -> vector<8x16x16xf32>
    %41 = arith.addf %37, %40 : vector<8x16x16xf32>
    %cst_6 = arith.constant 3.68670953E-5 : f32
    %42 = vector.broadcast %cst_6 : f32 to vector<8x16x16xf32>
    %43 = arith.mulf %42, %41 : vector<8x16x16xf32>
    %44 = arith.addf %34, %43 : vector<8x16x16xf32>
    %c0_7 = arith.constant 0 : index
    %c0_8 = arith.constant 0 : index
    %c0_9 = arith.constant 0 : index
    %45 = vector.load %arg2[%c0_7, %c0_8, %c0_9] : memref<8x16x16xf32, #tpu.memory_space<vmem>>, vector<8x16x16xf32>
    tpu.vector_store %arg2[%c0_7, %c0_8, %c0_9], %44 {strides = array<i32>} : memref<8x16x16xf32, #tpu.memory_space<vmem>>, vector<8x16x16xf32>,
    return
  }
  func.func @transform_0(%arg0: i32) -> (i32, i32, i32) {
    %c0_i32 = arith.constant 0 : i32
    %c0_i32_0 = arith.constant 0 : i32
    %c0_i32_1 = arith.constant 0 : i32
    return %arg0, %c0_i32, %c0_i32_0 : i32, i32, i32
  }
  func.func @transform_1(%arg0: i32) -> (i32, i32, i32) {
    %c0_i32 = arith.constant 0 : i32
    %c0_i32_0 = arith.constant 0 : i32
    %c0_i32_1 = arith.constant 0 : i32
    return %arg0, %c0_i32, %c0_i32_0 : i32, i32, i32
  }
}

</mosaic_0001>

<llo_original>
// kernel: tpu_custom_call.1
$region0: #{tpu_custom_call.1}
  #allocation0 [shape = 'u32[]', space=smem, size = 0x4, offset = 0x4, fixed_abs, tag = 'smem constant byte address 0x4 - core index']
  #allocation1 [shape = 'u32[72,128]{1,0:T(1,128)}', space=vmem, size = 0x9000, scoped, tag = 'internal scratch']
  %s0 = inlined_call_operand.hbm [shape: f32[8,16,16], index: 0, kind: input, shape index: {}]
  %s1 = inlined_call_operand.hbm [shape: f32[8,16,16], index: 1, kind: output, shape index: {}]
  %s2 = sld [smem:[#allocation0]]
  $region18: #{tpu_custom_call.1} parent=0
    _
  %s4 = ssub.s32 1, %s2
  %s5 = scalar_select 0, %s4, %s2
  $region1: #{tpu_custom_call.1} parent=0
    #allocation2 [shape = 'u8[65536]{0}', space=vmem, size = 0x10000, scoped, tag = 'input window, operand 0, single buffered']
    #allocation3 [shape = 's32[1]{0}', space=sflag, size = 0x4, scoped, tag = 'scoped memory for tpu_custom_call.1']
    #allocation4 [shape = 's32[1]{0}', space=sflag, size = 0x4, scoped, tag = 'scoped memory for tpu_custom_call.1']
    #allocation5 [shape = 'u8[65536]{0}', space=vmem, size = 0x10000, scoped, tag = 'output window, operand 0, single buffered']
    %6 = vsyncpa [#allocation3], 0
    %7 = vsyncpa [#allocation4], 0
    // Predicated region
    $region2: #{tpu_custom_call.1} parent=1 // pred_check
      _
    $region3: #{tpu_custom_call.1} parent=1 // pred_check_branch
      %9 = sbr.rel (0) target = $region5
    $region4: #{tpu_custom_call.1} parent=1 // pred_region
      %11 = vsyncadd [#allocation3], 0
      %s12 = sshll.u32 %s0, 4
      %s13 = int_to_ptr.hbm [resolvable:$true] %s12
      %s14 = sshll.u32 [#allocation2], 4
      %s15 = int_to_ptr.vmem [resolvable:$true] %s14
      %20 = dma.hbm_to_vmem [thread:$0]  %s13, 2048, %s15, [#allocation3], 128, 128, 8
    $region5: #{tpu_custom_call.1} parent=1 // pred_fallthru
      _
    // Predicated region
    $region6: #{tpu_custom_call.1} parent=1 // pred_check
      _
    $region7: #{tpu_custom_call.1} parent=1 // pred_check_branch
      %22 = sbr.rel (0) target = $region9
    $region8: #{tpu_custom_call.1} parent=1 // pred_region
      %24 = dma.done [#allocation3], 2048
    $region9: #{tpu_custom_call.1} parent=1 // pred_fallthru
      _
    %v25 = vld [vmem:[#allocation2] sm:$0xff]
    %v26 = vld [vmem:[#allocation2 + $0x8] sm:$0xff]
    %v27 = vld [vmem:[#allocation2 + $0x10] sm:$0xff]
    %v28 = vld [vmem:[#allocation2 + $0x18] sm:$0xff]
    %v29 = vld [vmem:[#allocation2 + $0x20] sm:$0xff]
    %v30 = vld [vmem:[#allocation2 + $0x28] sm:$0xff]
    %v31 = vld [vmem:[#allocation2 + $0x30] sm:$0xff]
    %v32 = vld [vmem:[#allocation2 + $0x38] sm:$0xff]
    %v33 = vld [vmem:[#allocation2 + $0x40] sm:$0xff]
    %v34 = vld [vmem:[#allocation2 + $0x48] sm:$0xff]
    %v35 = vld [vmem:[#allocation2 + $0x50] sm:$0xff]
    %v36 = vld [vmem:[#allocation2 + $0x58] sm:$0xff]
    %v37 = vld [vmem:[#allocation2 + $0x60] sm:$0xff]
    %v38 = vld [vmem:[#allocation2 + $0x68] sm:$0xff]
    %v39 = vld [vmem:[#allocation2 + $0x70] sm:$0xff]
    %v40 = vld [vmem:[#allocation2 + $0x78] sm:$0xff]
    %v41 = vmul.f32 %v25, 0.6985918
    %v42 = vmul.f32 %v26, 0.6985918
    %v43 = vmul.f32 %v27, 0.6985918
    %v44 = vmul.f32 %v28, 0.6985918
    %v45 = vmul.f32 %v29, 0.6985918
    %v46 = vmul.f32 %v30, 0.6985918
    %v47 = vmul.f32 %v31, 0.6985918
    %v48 = vmul.f32 %v32, 0.6985918
    %v49 = vmul.f32 %v33, 0.6985918
    %v50 = vmul.f32 %v34, 0.6985918
    %v51 = vmul.f32 %v35, 0.6985918
    %v52 = vmul.f32 %v36, 0.6985918
    %v53 = vmul.f32 %v37, 0.6985918
    %v54 = vmul.f32 %v38, 0.6985918
    %v55 = vmul.f32 %v39, 0.6985918
    %v56 = vmul.f32 %v40, 0.6985918
    %v65 = vrot.slane %v26, 7
    %v66 = vrot.slane %v28, 7
    %v67 = vrot.slane %v30, 7
    %v68 = vrot.slane %v32, 7
    %v69 = vrot.slane %v34, 7
    %v70 = vrot.slane %v36, 7
    %v71 = vrot.slane %v38, 7
    %v72 = vrot.slane %v40, 7
    %vm89 = vcmask 1040384
    %v90 = vrot.slane %v25, 7
    %v91 = vsel %vm89, %v90, %v65
    %v92 = vrot.slane %v27, 7
    %v93 = vsel %vm89, %v92, %v66
    %v94 = vrot.slane %v29, 7
    %v95 = vsel %vm89, %v94, %v67
    %v96 = vrot.slane %v31, 7
    %v97 = vsel %vm89, %v96, %v68
    %v98 = vrot.slane %v33, 7
    %v99 = vsel %vm89, %v98, %v69
    %v100 = vrot.slane %v35, 7
    %v101 = vsel %vm89, %v100, %v70
    %v102 = vrot.slane %v37, 7
    %v103 = vsel %vm89, %v102, %v71
    %v104 = vrot.slane %v39, 7
    %v105 = vsel %vm89, %v104, %v72
    %v122 = vsel %vm89, %v65, %v90
    %v123 = vsel %vm89, %v66, %v92
    %v124 = vsel %vm89, %v67, %v94
    %v125 = vsel %vm89, %v68, %v96
    %v126 = vsel %vm89, %v69, %v98
    %v127 = vsel %vm89, %v70, %v100
    %v128 = vsel %vm89, %v71, %v102
    %v129 = vsel %vm89, %v72, %v104
    %vm130 = vcmask 1046528
    %v131 = vrot.slane %v25, 1
    %v132 = vrot.slane %v26, 1
    %v133 = vsel %vm130, %v131, %v132
    %v134 = vrot.slane %v27, 1
    %v135 = vrot.slane %v28, 1
    %v136 = vsel %vm130, %v134, %v135
    %v137 = vrot.slane %v29, 1
    %v138 = vrot.slane %v30, 1
    %v139 = vsel %vm130, %v137, %v138
    %v140 = vrot.slane %v31, 1
    %v141 = vrot.slane %v32, 1
    %v142 = vsel %vm130, %v140, %v141
    %v143 = vrot.slane %v33, 1
    %v144 = vrot.slane %v34, 1
    %v145 = vsel %vm130, %v143, %v144
    %v146 = vrot.slane %v35, 1
    %v147 = vrot.slane %v36, 1
    %v148 = vsel %vm130, %v146, %v147
    %v149 = vrot.slane %v37, 1
    %v150 = vrot.slane %v38, 1
    %v151 = vsel %vm130, %v149, %v150
    %v152 = vrot.slane %v39, 1
    %v153 = vrot.slane %v40, 1
    %v154 = vsel %vm130, %v152, %v153
    %v179 = vsel %vm130, %v132, %v131
    %v180 = vsel %vm130, %v135, %v134
    %v181 = vsel %vm130, %v138, %v137
    %v182 = vsel %vm130, %v141, %v140
    %v183 = vsel %vm130, %v144, %v143
    %v184 = vsel %vm130, %v147, %v146
    %v185 = vsel %vm130, %v150, %v149
    %v186 = vsel %vm130, %v153, %v152
    %v187 = vadd.f32 %v122, %v133
    %v188 = vadd.f32 %v91, %v179
    %v189 = vadd.f32 %v123, %v136
    %v190 = vadd.f32 %v93, %v180
    %v191 = vadd.f32 %v124, %v139
    %v192 = vadd.f32 %v95, %v181
    %v193 = vadd.f32 %v125, %v142
    %v194 = vadd.f32 %v97, %v182
    %v195 = vadd.f32 %v126, %v145
    %v196 = vadd.f32 %v99, %v183
    %v197 = vadd.f32 %v127, %v148
    %v198 = vadd.f32 %v101, %v184
    %v199 = vadd.f32 %v128, %v151
    %v200 = vadd.f32 %v103, %v185
    %v201 = vadd.f32 %v129, %v154
    %v202 = vadd.f32 %v105, %v186
    %v203 = vmul.f32 %v187, 0.15066722
    %v204 = vmul.f32 %v188, 0.15066722
    %v205 = vmul.f32 %v189, 0.15066722
    %v206 = vmul.f32 %v190, 0.15066722
    %v207 = vmul.f32 %v191, 0.15066722
    %v208 = vmul.f32 %v192, 0.15066722
    %v209 = vmul.f32 %v193, 0.15066722
    %v210 = vmul.f32 %v194, 0.15066722
    %v211 = vmul.f32 %v195, 0.15066722
    %v212 = vmul.f32 %v196, 0.15066722
    %v213 = vmul.f32 %v197, 0.15066722
    %v214 = vmul.f32 %v198, 0.15066722
    %v215 = vmul.f32 %v199, 0.15066722
    %v216 = vmul.f32 %v200, 0.15066722
    %v217 = vmul.f32 %v201, 0.15066722
    %v218 = vmul.f32 %v202, 0.15066722
    %v219 = vadd.f32 %v41, %v203
    %v220 = vadd.f32 %v42, %v204
    %v221 = vadd.f32 %v43, %v205
    %v222 = vadd.f32 %v44, %v206
    %v223 = vadd.f32 %v45, %v207
    %v224 = vadd.f32 %v46, %v208
    %v225 = vadd.f32 %v47, %v209
    %v226 = vadd.f32 %v48, %v210
    %v227 = vadd.f32 %v49, %v211
    %v228 = vadd.f32 %v50, %v212
    %v229 = vadd.f32 %v51, %v213
    %v230 = vadd.f32 %v52, %v214
    %v231 = vadd.f32 %v53, %v215
    %v232 = vadd.f32 %v54, %v216
    %v233 = vadd.f32 %v55, %v217
    %v234 = vadd.f32 %v56, %v218
    %v235 = vrot.slane %v26, 6
    %v236 = vrot.slane %v28, 6
    %v237 = vrot.slane %v30, 6
    %v238 = vrot.slane %v32, 6
    %v239 = vrot.slane %v34, 6
    %v240 = vrot.slane %v36, 6
    %v241 = vrot.slane %v38, 6
    %v242 = vrot.slane %v40, 6
    %vm251 = vcmask 1041408
    %v252 = vrot.slane %v25, 6
    %v253 = vsel %vm251, %v252, %v235
    %v254 = vrot.slane %v27, 6
    %v255 = vsel %vm251, %v254, %v236
    %v256 = vrot.slane %v29, 6
    %v257 = vsel %vm251, %v256, %v237
    %v258 = vrot.slane %v31, 6
    %v259 = vsel %vm251, %v258, %v238
    %v260 = vrot.slane %v33, 6
    %v261 = vsel %vm251, %v260, %v239
    %v262 = vrot.slane %v35, 6
    %v263 = vsel %vm251, %v262, %v240
    %v264 = vrot.slane %v37, 6
    %v265 = vsel %vm251, %v264, %v241
    %v266 = vrot.slane %v39, 6
    %v267 = vsel %vm251, %v266, %v242
    %v284 = vsel %vm251, %v235, %v252
    %v285 = vsel %vm251, %v236, %v254
    %v286 = vsel %vm251, %v237, %v256
    %v287 = vsel %vm251, %v238, %v258
    %v288 = vsel %vm251, %v239, %v260
    %v289 = vsel %vm251, %v240, %v262
    %v290 = vsel %vm251, %v241, %v264
    %v291 = vsel %vm251, %v242, %v266
    %vm292 = vcmask 1045504
    %v293 = vrot.slane %v25, 2
    %v294 = vrot.slane %v26, 2
    %v295 = vsel %vm292, %v293, %v294
    %v296 = vrot.slane %v27, 2
    %v297 = vrot.slane %v28, 2
    %v298 = vsel %vm292, %v296, %v297
    %v299 = vrot.slane %v29, 2
    %v300 = vrot.slane %v30, 2
    %v301 = vsel %vm292, %v299, %v300
    %v302 = vrot.slane %v31, 2
    %v303 = vrot.slane %v32, 2
    %v304 = vsel %vm292, %v302, %v303
    %v305 = vrot.slane %v33, 2
    %v306 = vrot.slane %v34, 2
    %v307 = vsel %vm292, %v305, %v306
    %v308 = vrot.slane %v35, 2
    %v309 = vrot.slane %v36, 2
    %v310 = vsel %vm292, %v308, %v309
    %v311 = vrot.slane %v37, 2
    %v312 = vrot.slane %v38, 2
    %v313 = vsel %vm292, %v311, %v312
    %v314 = vrot.slane %v39, 2
    %v315 = vrot.slane %v40, 2
    %v316 = vsel %vm292, %v314, %v315
    %v341 = vsel %vm292, %v294, %v293
    %v342 = vsel %vm292, %v297, %v296
    %v343 = vsel %vm292, %v300, %v299
    %v344 = vsel %vm292, %v303, %v302
    %v345 = vsel %vm292, %v306, %v305
    %v346 = vsel %vm292, %v309, %v308
    %v347 = vsel %vm292, %v312, %v311
    %v348 = vsel %vm292, %v315, %v314
    %v349 = vadd.f32 %v284, %v295
    %v350 = vadd.f32 %v253, %v341
    %v351 = vadd.f32 %v285, %v298
    %v352 = vadd.f32 %v255, %v342
    %v353 = vadd.f32 %v286, %v301
    %v354 = vadd.f32 %v257, %v343
    %v355 = vadd.f32 %v287, %v304
    %v356 = vadd.f32 %v259, %v344
    %v357 = vadd.f32 %v288, %v307
    %v358 = vadd.f32 %v261, %v345
    %v359 = vadd.f32 %v289, %v310
    %v360 = vadd.f32 %v263, %v346
    %v361 = vadd.f32 %v290, %v313
    %v362 = vadd.f32 %v265, %v347
    %v363 = vadd.f32 %v291, %v316
    %v364 = vadd.f32 %v267, %v348
    %v365 = vmul.f32 %v349, 3.6867095e-05
    %v366 = vmul.f32 %v350, 3.6867095e-05
    %v367 = vmul.f32 %v351, 3.6867095e-05
    %v368 = vmul.f32 %v352, 3.6867095e-05
    %v369 = vmul.f32 %v353, 3.6867095e-05
    %v370 = vmul.f32 %v354, 3.6867095e-05
    %v371 = vmul.f32 %v355, 3.6867095e-05
    %v372 = vmul.f32 %v356, 3.6867095e-05
    %v373 = vmul.f32 %v357, 3.6867095e-05
    %v374 = vmul.f32 %v358, 3.6867095e-05
    %v375 = vmul.f32 %v359, 3.6867095e-05
    %v376 = vmul.f32 %v360, 3.6867095e-05
    %v377 = vmul.f32 %v361, 3.6867095e-05
    %v378 = vmul.f32 %v362, 3.6867095e-05
    %v379 = vmul.f32 %v363, 3.6867095e-05
    %v380 = vmul.f32 %v364, 3.6867095e-05
    %v381 = vadd.f32 %v219, %v365
    %v382 = vadd.f32 %v220, %v366
    %v383 = vadd.f32 %v221, %v367
    %v384 = vadd.f32 %v222, %v368
    %v385 = vadd.f32 %v223, %v369
    %v386 = vadd.f32 %v224, %v370
    %v387 = vadd.f32 %v225, %v371
    %v388 = vadd.f32 %v226, %v372
    %v389 = vadd.f32 %v227, %v373
    %v390 = vadd.f32 %v228, %v374
    %v391 = vadd.f32 %v229, %v375
    %v392 = vadd.f32 %v230, %v376
    %v393 = vadd.f32 %v231, %v377
    %v394 = vadd.f32 %v232, %v378
    %v395 = vadd.f32 %v233, %v379
    %v396 = vadd.f32 %v234, %v380
    %v397 = vmul.f32 %v381, 0.6985918
    %v398 = vmul.f32 %v382, 0.6985918
    %v399 = vmul.f32 %v383, 0.6985918
    %v400 = vmul.f32 %v384, 0.6985918
    %v401 = vmul.f32 %v385, 0.6985918
    %v402 = vmul.f32 %v386, 0.6985918
    %v403 = vmul.f32 %v387, 0.6985918
    %v404 = vmul.f32 %v388, 0.6985918
    %v405 = vmul.f32 %v389, 0.6985918
    %v406 = vmul.f32 %v390, 0.6985918
    %v407 = vmul.f32 %v391, 0.6985918
    %v408 = vmul.f32 %v392, 0.6985918
    %v409 = vmul.f32 %v393, 0.6985918
    %v410 = vmul.f32 %v394, 0.6985918
    %v411 = vmul.f32 %v395, 0.6985918
    %v412 = vmul.f32 %v396, 0.6985918
    %429 = vrot.lane.b32.xlu0 %v381, 113
    %v430 = vpop.permute.xlu0 %429
    %431 = vrot.lane.b32.xlu0 %v382, 113
    %v432 = vpop.permute.xlu0 %431
    %433 = vrot.lane.b32.xlu0 %v383, 113
    %v434 = vpop.permute.xlu0 %433
    %435 = vrot.lane.b32.xlu0 %v384, 113
    %v436 = vpop.permute.xlu0 %435
    %437 = vrot.lane.b32.xlu0 %v385, 113
    %v438 = vpop.permute.xlu0 %437
    %439 = vrot.lane.b32.xlu0 %v386, 113
    %v440 = vpop.permute.xlu0 %439
    %441 = vrot.lane.b32.xlu0 %v387, 113
    %v442 = vpop.permute.xlu0 %441
    %443 = vrot.lane.b32.xlu0 %v388, 113
    %v444 = vpop.permute.xlu0 %443
    %445 = vrot.lane.b32.xlu0 %v389, 113
    %v446 = vpop.permute.xlu0 %445
    %447 = vrot.lane.b32.xlu0 %v390, 113
    %v448 = vpop.permute.xlu0 %447
    %449 = vrot.lane.b32.xlu0 %v391, 113
    %v450 = vpop.permute.xlu0 %449
    %451 = vrot.lane.b32.xlu0 %v392, 113
    %v452 = vpop.permute.xlu0 %451
    %453 = vrot.lane.b32.xlu0 %v393, 113
    %v454 = vpop.permute.xlu0 %453
    %455 = vrot.lane.b32.xlu0 %v394, 113
    %v456 = vpop.permute.xlu0 %455
    %457 = vrot.lane.b32.xlu0 %v395, 113
    %v458 = vpop.permute.xlu0 %457
    %459 = vrot.lane.b32.xlu0 %v396, 113
    %v460 = vpop.permute.xlu0 %459
    %477 = vrot.lane.b32.xlu0 %v381, 1
    %v478 = vpop.permute.xlu0 %477
    %479 = vrot.lane.b32.xlu0 %v382, 1
    %v480 = vpop.permute.xlu0 %479
    %481 = vrot.lane.b32.xlu0 %v383, 1
    %v482 = vpop.permute.xlu0 %481
    %483 = vrot.lane.b32.xlu0 %v384, 1
    %v484 = vpop.permute.xlu0 %483
    %485 = vrot.lane.b32.xlu0 %v385, 1
    %v486 = vpop.permute.xlu0 %485
    %487 = vrot.lane.b32.xlu0 %v386, 1
    %v488 = vpop.permute.xlu0 %487
    %489 = vrot.lane.b32.xlu0 %v387, 1
    %v490 = vpop.permute.xlu0 %489
    %491 = vrot.lane.b32.xlu0 %v388, 1
    %v492 = vpop.permute.xlu0 %491
    %493 = vrot.lane.b32.xlu0 %v389, 1
    %v494 = vpop.permute.xlu0 %493
    %495 = vrot.lane.b32.xlu0 %v390, 1
    %v496 = vpop.permute.xlu0 %495
    %497 = vrot.lane.b32.xlu0 %v391, 1
    %v498 = vpop.permute.xlu0 %497
    %499 = vrot.lane.b32.xlu0 %v392, 1
    %v500 = vpop.permute.xlu0 %499
    %501 = vrot.lane.b32.xlu0 %v393, 1
    %v502 = vpop.permute.xlu0 %501
    %503 = vrot.lane.b32.xlu0 %v394, 1
    %v504 = vpop.permute.xlu0 %503
    %505 = vrot.lane.b32.xlu0 %v395, 1
    %v506 = vpop.permute.xlu0 %505
    %507 = vrot.lane.b32.xlu0 %v396, 1
    %v508 = vpop.permute.xlu0 %507
    %vm525 = vcmask 7168
    %v526 = vsel %vm525, %v430, %v478
    %v527 = vsel %vm525, %v432, %v480
    %v528 = vsel %vm525, %v434, %v482
    %v529 = vsel %vm525, %v436, %v484
    %v530 = vsel %vm525, %v438, %v486
    %v531 = vsel %vm525, %v440, %v488
    %v532 = vsel %vm525, %v442, %v490
    %v533 = vsel %vm525, %v444, %v492
    %v534 = vsel %vm525, %v446, %v494
    %v535 = vsel %vm525, %v448, %v496
    %v536 = vsel %vm525, %v450, %v498
    %v537 = vsel %vm525, %v452, %v500
    %v538 = vsel %vm525, %v454, %v502
    %v539 = vsel %vm525, %v456, %v504
    %v540 = vsel %vm525, %v458, %v506
    %v541 = vsel %vm525, %v460, %v508
    %542 = vrot.lane.b32.xlu0 %v381, 127
    %v543 = vpop.permute.xlu0 %542
    %544 = vrot.lane.b32.xlu0 %v382, 127
    %v545 = vpop.permute.xlu0 %544
    %546 = vrot.lane.b32.xlu0 %v383, 127
    %v547 = vpop.permute.xlu0 %546
    %548 = vrot.lane.b32.xlu0 %v384, 127
    %v549 = vpop.permute.xlu0 %548
    %550 = vrot.lane.b32.xlu0 %v385, 127
    %v551 = vpop.permute.xlu0 %550
    %552 = vrot.lane.b32.xlu0 %v386, 127
    %v553 = vpop.permute.xlu0 %552
    %554 = vrot.lane.b32.xlu0 %v387, 127
    %v555 = vpop.permute.xlu0 %554
    %556 = vrot.lane.b32.xlu0 %v388, 127
    %v557 = vpop.permute.xlu0 %556
    %558 = vrot.lane.b32.xlu0 %v389, 127
    %v559 = vpop.permute.xlu0 %558
    %560 = vrot.lane.b32.xlu0 %v390, 127
    %v561 = vpop.permute.xlu0 %560
    %562 = vrot.lane.b32.xlu0 %v391, 127
    %v563 = vpop.permute.xlu0 %562
    %564 = vrot.lane.b32.xlu0 %v392, 127
    %v565 = vpop.permute.xlu0 %564
    %566 = vrot.lane.b32.xlu0 %v393, 127
    %v567 = vpop.permute.xlu0 %566
    %568 = vrot.lane.b32.xlu0 %v394, 127
    %v569 = vpop.permute.xlu0 %568
    %570 = vrot.lane.b32.xlu0 %v395, 127
    %v571 = vpop.permute.xlu0 %570
    %572 = vrot.lane.b32.xlu0 %v396, 127
    %v573 = vpop.permute.xlu0 %572
    %590 = vrot.lane.b32.xlu0 %v381, 15
    %v591 = vpop.permute.xlu0 %590
    %592 = vrot.lane.b32.xlu0 %v382, 15
    %v593 = vpop.permute.xlu0 %592
    %594 = vrot.lane.b32.xlu0 %v383, 15
    %v595 = vpop.permute.xlu0 %594
    %596 = vrot.lane.b32.xlu0 %v384, 15
    %v597 = vpop.permute.xlu0 %596
    %598 = vrot.lane.b32.xlu0 %v385, 15
    %v599 = vpop.permute.xlu0 %598
    %600 = vrot.lane.b32.xlu0 %v386, 15
    %v601 = vpop.permute.xlu0 %600
    %602 = vrot.lane.b32.xlu0 %v387, 15
    %v603 = vpop.permute.xlu0 %602
    %604 = vrot.lane.b32.xlu0 %v388, 15
    %v605 = vpop.permute.xlu0 %604
    %606 = vrot.lane.b32.xlu0 %v389, 15
    %v607 = vpop.permute.xlu0 %606
    %608 = vrot.lane.b32.xlu0 %v390, 15
    %v609 = vpop.permute.xlu0 %608
    %610 = vrot.lane.b32.xlu0 %v391, 15
    %v611 = vpop.permute.xlu0 %610
    %612 = vrot.lane.b32.xlu0 %v392, 15
    %v613 = vpop.permute.xlu0 %612
    %614 = vrot.lane.b32.xlu0 %v393, 15
    %v615 = vpop.permute.xlu0 %614
    %616 = vrot.lane.b32.xlu0 %v394, 15
    %v617 = vpop.permute.xlu0 %616
    %618 = vrot.lane.b32.xlu0 %v395, 15
    %v619 = vpop.permute.xlu0 %618
    %620 = vrot.lane.b32.xlu0 %v396, 15
    %v621 = vpop.permute.xlu0 %620
    %vm638 = vcmask 121856
    %v639 = vsel %vm638, %v543, %v591
    %v640 = vsel %vm638, %v545, %v593
    %v641 = vsel %vm638, %v547, %v595
    %v642 = vsel %vm638, %v549, %v597
    %v643 = vsel %vm638, %v551, %v599
    %v644 = vsel %vm638, %v553, %v601
    %v645 = vsel %vm638, %v555, %v603
    %v646 = vsel %vm638, %v557, %v605
    %v647 = vsel %vm638, %v559, %v607
    %v648 = vsel %vm638, %v561, %v609
    %v649 = vsel %vm638, %v563, %v611
    %v650 = vsel %vm638, %v565, %v613
    %v651 = vsel %vm638, %v567, %v615
    %v652 = vsel %vm638, %v569, %v617
    %v653 = vsel %vm638, %v571, %v619
    %v654 = vsel %vm638, %v573, %v621
    %v655 = vadd.f32 %v526, %v639
    %v656 = vadd.f32 %v527, %v640
    %v657 = vadd.f32 %v528, %v641
    %v658 = vadd.f32 %v529, %v642
    %v659 = vadd.f32 %v530, %v643
    %v660 = vadd.f32 %v531, %v644
    %v661 = vadd.f32 %v532, %v645
    %v662 = vadd.f32 %v533, %v646
    %v663 = vadd.f32 %v534, %v647
    %v664 = vadd.f32 %v535, %v648
    %v665 = vadd.f32 %v536, %v649
    %v666 = vadd.f32 %v537, %v650
    %v667 = vadd.f32 %v538, %v651
    %v668 = vadd.f32 %v539, %v652
    %v669 = vadd.f32 %v540, %v653
    %v670 = vadd.f32 %v541, %v654
    %v671 = vmul.f32 %v655, 0.15066722
    %v672 = vmul.f32 %v656, 0.15066722
    %v673 = vmul.f32 %v657, 0.15066722
    %v674 = vmul.f32 %v658, 0.15066722
    %v675 = vmul.f32 %v659, 0.15066722
    %v676 = vmul.f32 %v660, 0.15066722
    %v677 = vmul.f32 %v661, 0.15066722
    %v678 = vmul.f32 %v662, 0.15066722
    %v679 = vmul.f32 %v663, 0.15066722
    %v680 = vmul.f32 %v664, 0.15066722
    %v681 = vmul.f32 %v665, 0.15066722
    %v682 = vmul.f32 %v666, 0.15066722
    %v683 = vmul.f32 %v667, 0.15066722
    %v684 = vmul.f32 %v668, 0.15066722
    %v685 = vmul.f32 %v669, 0.15066722
    %v686 = vmul.f32 %v670, 0.15066722
    %v687 = vadd.f32 %v397, %v671
    %v688 = vadd.f32 %v398, %v672
    %v689 = vadd.f32 %v399, %v673
    %v690 = vadd.f32 %v400, %v674
    %v691 = vadd.f32 %v401, %v675
    %v692 = vadd.f32 %v402, %v676
    %v693 = vadd.f32 %v403, %v677
    %v694 = vadd.f32 %v404, %v678
    %v695 = vadd.f32 %v405, %v679
    %v696 = vadd.f32 %v406, %v680
    %v697 = vadd.f32 %v407, %v681
    %v698 = vadd.f32 %v408, %v682
    %v699 = vadd.f32 %v409, %v683
    %v700 = vadd.f32 %v410, %v684
    %v701 = vadd.f32 %v411, %v685
    %v702 = vadd.f32 %v412, %v686
    %703 = vrot.lane.b32.xlu0 %v381, 114
    %v704 = vpop.permute.xlu0 %703
    %705 = vrot.lane.b32.xlu0 %v382, 114
    %v706 = vpop.permute.xlu0 %705
    %707 = vrot.lane.b32.xlu0 %v383, 114
    %v708 = vpop.permute.xlu0 %707
    %709 = vrot.lane.b32.xlu0 %v384, 114
    %v710 = vpop.permute.xlu0 %709
    %711 = vrot.lane.b32.xlu0 %v385, 114
    %v712 = vpop.permute.xlu0 %711
    %713 = vrot.lane.b32.xlu0 %v386, 114
    %v714 = vpop.permute.xlu0 %713
    %715 = vrot.lane.b32.xlu0 %v387, 114
    %v716 = vpop.permute.xlu0 %715
    %717 = vrot.lane.b32.xlu0 %v388, 114
    %v718 = vpop.permute.xlu0 %717
    %719 = vrot.lane.b32.xlu0 %v389, 114
    %v720 = vpop.permute.xlu0 %719
    %721 = vrot.lane.b32.xlu0 %v390, 114
    %v722 = vpop.permute.xlu0 %721
    %723 = vrot.lane.b32.xlu0 %v391, 114
    %v724 = vpop.permute.xlu0 %723
    %725 = vrot.lane.b32.xlu0 %v392, 114
    %v726 = vpop.permute.xlu0 %725
    %727 = vrot.lane.b32.xlu0 %v393, 114
    %v728 = vpop.permute.xlu0 %727
    %729 = vrot.lane.b32.xlu0 %v394, 114
    %v730 = vpop.permute.xlu0 %729
    %731 = vrot.lane.b32.xlu0 %v395, 114
    %v732 = vpop.permute.xlu0 %731
    %733 = vrot.lane.b32.xlu0 %v396, 114
    %v734 = vpop.permute.xlu0 %733
    %751 = vrot.lane.b32.xlu0 %v381, 2
    %v752 = vpop.permute.xlu0 %751
    %753 = vrot.lane.b32.xlu0 %v382, 2
    %v754 = vpop.permute.xlu0 %753
    %755 = vrot.lane.b32.xlu0 %v383, 2
    %v756 = vpop.permute.xlu0 %755
    %757 = vrot.lane.b32.xlu0 %v384, 2
    %v758 = vpop.permute.xlu0 %757
    %759 = vrot.lane.b32.xlu0 %v385, 2
    %v760 = vpop.permute.xlu0 %759
    %761 = vrot.lane.b32.xlu0 %v386, 2
    %v762 = vpop.permute.xlu0 %761
    %763 = vrot.lane.b32.xlu0 %v387, 2
    %v764 = vpop.permute.xlu0 %763
    %765 = vrot.lane.b32.xlu0 %v388, 2
    %v766 = vpop.permute.xlu0 %765
    %767 = vrot.lane.b32.xlu0 %v389, 2
    %v768 = vpop.permute.xlu0 %767
    %769 = vrot.lane.b32.xlu0 %v390, 2
    %v770 = vpop.permute.xlu0 %769
    %771 = vrot.lane.b32.xlu0 %v391, 2
    %v772 = vpop.permute.xlu0 %771
    %773 = vrot.lane.b32.xlu0 %v392, 2
    %v774 = vpop.permute.xlu0 %773
    %775 = vrot.lane.b32.xlu0 %v393, 2
    %v776 = vpop.permute.xlu0 %775
    %777 = vrot.lane.b32.xlu0 %v394, 2
    %v778 = vpop.permute.xlu0 %777
    %779 = vrot.lane.b32.xlu0 %v395, 2
    %v780 = vpop.permute.xlu0 %779
    %781 = vrot.lane.b32.xlu0 %v396, 2
    %v782 = vpop.permute.xlu0 %781
    %vm799 = vcmask 15360
    %v800 = vsel %vm799, %v704, %v752
    %v801 = vsel %vm799, %v706, %v754
    %v802 = vsel %vm799, %v708, %v756
    %v803 = vsel %vm799, %v710, %v758
    %v804 = vsel %vm799, %v712, %v760
    %v805 = vsel %vm799, %v714, %v762
    %v806 = vsel %vm799, %v716, %v764
    %v807 = vsel %vm799, %v718, %v766
    %v808 = vsel %vm799, %v720, %v768
    %v809 = vsel %vm799, %v722, %v770
    %v810 = vsel %vm799, %v724, %v772
    %v811 = vsel %vm799, %v726, %v774
    %v812 = vsel %vm799, %v728, %v776
    %v813 = vsel %vm799, %v730, %v778
    %v814 = vsel %vm799, %v732, %v780
    %v815 = vsel %vm799, %v734, %v782
    %816 = vrot.lane.b32.xlu0 %v381, 126
    %v817 = vpop.permute.xlu0 %816
    %818 = vrot.lane.b32.xlu0 %v382, 126
    %v819 = vpop.permute.xlu0 %818
    %820 = vrot.lane.b32.xlu0 %v383, 126
    %v821 = vpop.permute.xlu0 %820
    %822 = vrot.lane.b32.xlu0 %v384, 126
    %v823 = vpop.permute.xlu0 %822
    %824 = vrot.lane.b32.xlu0 %v385, 126
    %v825 = vpop.permute.xlu0 %824
    %826 = vrot.lane.b32.xlu0 %v386, 126
    %v827 = vpop.permute.xlu0 %826
    %828 = vrot.lane.b32.xlu0 %v387, 126
    %v829 = vpop.permute.xlu0 %828
    %830 = vrot.lane.b32.xlu0 %v388, 126
    %v831 = vpop.permute.xlu0 %830
    %832 = vrot.lane.b32.xlu0 %v389, 126
    %v833 = vpop.permute.xlu0 %832
    %834 = vrot.lane.b32.xlu0 %v390, 126
    %v835 = vpop.permute.xlu0 %834
    %836 = vrot.lane.b32.xlu0 %v391, 126
    %v837 = vpop.permute.xlu0 %836
    %838 = vrot.lane.b32.xlu0 %v392, 126
    %v839 = vpop.permute.xlu0 %838
    %840 = vrot.lane.b32.xlu0 %v393, 126
    %v841 = vpop.permute.xlu0 %840
    %842 = vrot.lane.b32.xlu0 %v394, 126
    %v843 = vpop.permute.xlu0 %842
    %844 = vrot.lane.b32.xlu0 %v395, 126
    %v845 = vpop.permute.xlu0 %844
    %846 = vrot.lane.b32.xlu0 %v396, 126
    %v847 = vpop.permute.xlu0 %846
    %864 = vrot.lane.b32.xlu0 %v381, 14
    %v865 = vpop.permute.xlu0 %864
    %866 = vrot.lane.b32.xlu0 %v382, 14
    %v867 = vpop.permute.xlu0 %866
    %868 = vrot.lane.b32.xlu0 %v383, 14
    %v869 = vpop.permute.xlu0 %868
    %870 = vrot.lane.b32.xlu0 %v384, 14
    %v871 = vpop.permute.xlu0 %870
    %872 = vrot.lane.b32.xlu0 %v385, 14
    %v873 = vpop.permute.xlu0 %872
    %874 = vrot.lane.b32.xlu0 %v386, 14
    %v875 = vpop.permute.xlu0 %874
    %876 = vrot.lane.b32.xlu0 %v387, 14
    %v877 = vpop.permute.xlu0 %876
    %878 = vrot.lane.b32.xlu0 %v388, 14
    %v879 = vpop.permute.xlu0 %878
    %880 = vrot.lane.b32.xlu0 %v389, 14
    %v881 = vpop.permute.xlu0 %880
    %882 = vrot.lane.b32.xlu0 %v390, 14
    %v883 = vpop.permute.xlu0 %882
    %884 = vrot.lane.b32.xlu0 %v391, 14
    %v885 = vpop.permute.xlu0 %884
    %886 = vrot.lane.b32.xlu0 %v392, 14
    %v887 = vpop.permute.xlu0 %886
    %888 = vrot.lane.b32.xlu0 %v393, 14
    %v889 = vpop.permute.xlu0 %888
    %890 = vrot.lane.b32.xlu0 %v394, 14
    %v891 = vpop.permute.xlu0 %890
    %892 = vrot.lane.b32.xlu0 %v395, 14
    %v893 = vpop.permute.xlu0 %892
    %894 = vrot.lane.b32.xlu0 %v396, 14
    %v895 = vpop.permute.xlu0 %894
    %vm912 = vcmask 113664
    %v913 = vsel %vm912, %v817, %v865
    %v914 = vsel %vm912, %v819, %v867
    %v915 = vsel %vm912, %v821, %v869
    %v916 = vsel %vm912, %v823, %v871
    %v917 = vsel %vm912, %v825, %v873
    %v918 = vsel %vm912, %v827, %v875
    %v919 = vsel %vm912, %v829, %v877
    %v920 = vsel %vm912, %v831, %v879
    %v921 = vsel %vm912, %v833, %v881
    %v922 = vsel %vm912, %v835, %v883
    %v923 = vsel %vm912, %v837, %v885
    %v924 = vsel %vm912, %v839, %v887
    %v925 = vsel %vm912, %v841, %v889
    %v926 = vsel %vm912, %v843, %v891
    %v927 = vsel %vm912, %v845, %v893
    %v928 = vsel %vm912, %v847, %v895
    %v929 = vadd.f32 %v800, %v913
    %v930 = vadd.f32 %v801, %v914
    %v931 = vadd.f32 %v802, %v915
    %v932 = vadd.f32 %v803, %v916
    %v933 = vadd.f32 %v804, %v917
    %v934 = vadd.f32 %v805, %v918
    %v935 = vadd.f32 %v806, %v919
    %v936 = vadd.f32 %v807, %v920
    %v937 = vadd.f32 %v808, %v921
    %v938 = vadd.f32 %v809, %v922
    %v939 = vadd.f32 %v810, %v923
    %v940 = vadd.f32 %v811, %v924
    %v941 = vadd.f32 %v812, %v925
    %v942 = vadd.f32 %v813, %v926
    %v943 = vadd.f32 %v814, %v927
    %v944 = vadd.f32 %v815, %v928
    %v945 = vmul.f32 %v929, 3.6867095e-05
    %v946 = vmul.f32 %v930, 3.6867095e-05
    %v947 = vmul.f32 %v931, 3.6867095e-05
    %v948 = vmul.f32 %v932, 3.6867095e-05
    %v949 = vmul.f32 %v933, 3.6867095e-05
    %v950 = vmul.f32 %v934, 3.6867095e-05
    %v951 = vmul.f32 %v935, 3.6867095e-05
    %v952 = vmul.f32 %v936, 3.6867095e-05
    %v953 = vmul.f32 %v937, 3.6867095e-05
    %v954 = vmul.f32 %v938, 3.6867095e-05
    %v955 = vmul.f32 %v939, 3.6867095e-05
    %v956 = vmul.f32 %v940, 3.6867095e-05
    %v957 = vmul.f32 %v941, 3.6867095e-05
    %v958 = vmul.f32 %v942, 3.6867095e-05
    %v959 = vmul.f32 %v943, 3.6867095e-05
    %v960 = vmul.f32 %v944, 3.6867095e-05
    %v961 = vadd.f32 %v687, %v945
    %v962 = vadd.f32 %v688, %v946
    %v963 = vadd.f32 %v689, %v947
    %v964 = vadd.f32 %v690, %v948
    %v965 = vadd.f32 %v691, %v949
    %v966 = vadd.f32 %v692, %v950
    %v967 = vadd.f32 %v693, %v951
    %v968 = vadd.f32 %v694, %v952
    %v969 = vadd.f32 %v695, %v953
    %v970 = vadd.f32 %v696, %v954
    %v971 = vadd.f32 %v697, %v955
    %v972 = vadd.f32 %v698, %v956
    %v973 = vadd.f32 %v699, %v957
    %v974 = vadd.f32 %v700, %v958
    %v975 = vadd.f32 %v701, %v959
    %v976 = vadd.f32 %v702, %v960
    %vm977 = vcmask 130048
    %978 = vst.msk [vmem:[#allocation5] sm:$0xff] %vm977, %v961
    %979 = vst.msk [vmem:[#allocation5 + $0x8] sm:$0xff] %vm977, %v962
    %980 = vst.msk [vmem:[#allocation5 + $0x10] sm:$0xff] %vm977, %v963
    %981 = vst.msk [vmem:[#allocation5 + $0x18] sm:$0xff] %vm977, %v964
    %982 = vst.msk [vmem:[#allocation5 + $0x20] sm:$0xff] %vm977, %v965
    %983 = vst.msk [vmem:[#allocation5 + $0x28] sm:$0xff] %vm977, %v966
    %984 = vst.msk [vmem:[#allocation5 + $0x30] sm:$0xff] %vm977, %v967
    %985 = vst.msk [vmem:[#allocation5 + $0x38] sm:$0xff] %vm977, %v968
    %986 = vst.msk [vmem:[#allocation5 + $0x40] sm:$0xff] %vm977, %v969
    %987 = vst.msk [vmem:[#allocation5 + $0x48] sm:$0xff] %vm977, %v970
    %988 = vst.msk [vmem:[#allocation5 + $0x50] sm:$0xff] %vm977, %v971
    %989 = vst.msk [vmem:[#allocation5 + $0x58] sm:$0xff] %vm977, %v972
    %990 = vst.msk [vmem:[#allocation5 + $0x60] sm:$0xff] %vm977, %v973
    %991 = vst.msk [vmem:[#allocation5 + $0x68] sm:$0xff] %vm977, %v974
    %992 = vst.msk [vmem:[#allocation5 + $0x70] sm:$0xff] %vm977, %v975
    %993 = vst.msk [vmem:[#allocation5 + $0x78] sm:$0xff] %vm977, %v976
    // Predicated region
    $region10: #{tpu_custom_call.1} parent=1 // pred_check
      _
    $region11: #{tpu_custom_call.1} parent=1 // pred_check_branch
      %995 = sbr.rel (0) target = $region13
    $region12: #{tpu_custom_call.1} parent=1 // pred_region
      %997 = vsyncadd [#allocation4], 0
      %s998 = sshll.u32 [#allocation5], 4
      %s999 = int_to_ptr.vmem [resolvable:$true] %s998
      %s1000 = sshll.u32 %s1, 4
      %s1001 = int_to_ptr.hbm [resolvable:$true] %s1000
      %1006 = dma.vmem_to_hbm [thread:$0]  %s999, 2048, %s1001, [#allocation4], 128, 128, 8
    $region13: #{tpu_custom_call.1} parent=1 // pred_fallthru
      _
    // Predicated region
    $region14: #{tpu_custom_call.1} parent=1 // pred_check
      _
    $region15: #{tpu_custom_call.1} parent=1 // pred_check_branch
      %1008 = sbr.rel (0) target = $region17
    $region16: #{tpu_custom_call.1} parent=1 // pred_region
      %1010 = dma.done [#allocation4], 2048
    $region17: #{tpu_custom_call.1} parent=1 // pred_fallthru
      _
    %1011 = vsyncpa [#allocation3], 1
    %1012 = vsyncpa [#allocation4], 1

</llo_original>
